<compile_context>
chip_gen: v7x
topology: tpu7x:2x2x1
jax: 0.10.0
libtpu: 0.0.40
codegen_flags: <defaults>
</compile_context>

<pallas_src>
import functools

import jax
import jax.numpy as jnp
from jax.experimental import pallas as pl
from jax.experimental.pallas import tpu as pltpu


def _perm_equiv_kernel(x_ref, wcat_ref, bg_ref, o_ref, *,
                       block_b, n_set, d_in, d_out_p):
    # x_ref: (block_b, N, Din) block of the input.
    x = x_ref[...].astype(jnp.float32)                     # (TB, N, Din)

    # Set-wise max (the PyTorch `x.max(1, keepdim=True)`), f32 on the VPU/XLU.
    xm = jnp.max(x, axis=1, keepdims=True)                 # (TB, 1, Din)
    xm_b = jnp.broadcast_to(xm, x.shape)                   # (TB, N, Din) sublane bcast

    # Flatten the set dimension into the matmul M dimension (fills the MXU)
    # and fuse Gamma/Lambda into a single matmul via the K-concatenated LHS.
    rows = block_b * n_set
    x2 = x.reshape(rows, d_in)
    xm2 = xm_b.reshape(rows, d_in)
    xb = jnp.concatenate([x2, xm2], axis=-1)               # (rows, 2*Din)

    # ONE MXU pass: xb @ [Wg^T ; -Wl^T]  (f32 accumulation).
    y = jnp.dot(xb.astype(wcat_ref.dtype), wcat_ref[...],
                preferred_element_type=jnp.float32)        # (rows, Dout_p)
    y = y + bg_ref[...]                                    # f32 bias add

    # Lane-dense store: Dout_p is a multiple of 128.
    o_ref[...] = y.reshape(block_b, n_set, d_out_p).astype(o_ref.dtype)


def _pick_block_b(batch, n_set, max_rows=1024):
    """Batch elements per grid step.

    Whole batch in one grid step when it is small (kills per-step overhead for
    toy shapes); otherwise the largest divisor of `batch` keeping the MXU
    M-dim (block_b * n_set) within `max_rows`.
    """
    if batch * n_set <= max_rows:
        return batch
    for cand in range(batch, 0, -1):
        if batch % cand == 0 and cand * n_set <= max_rows:
            return cand
    return 1


def permutation_equivariant(x, gamma_w, gamma_b, lambda_w, *,
                            compute_dtype=None, block_b=None):
    """DeepSets PermutationEquivariant forward.

    x:        (B, N, Din)
    gamma_w:  (Dout, Din)  -- PyTorch nn.Linear weight layout
    gamma_b:  (Dout,)
    lambda_w: (Dout, Din)
    compute_dtype: optional dtype for the matmul operands (e.g. jnp.bfloat16
        on v6e/v7x); accumulation and element-wise math stay float32.
    """
    B, N, Din = x.shape
    Dout = gamma_w.shape[0]

    w_dtype = compute_dtype if compute_dtype is not None else x.dtype

    # Fused weight: [Wg^T ; -Wl^T] -> (2*Din, Dout) so one matmul computes
    # Gamma(x) - Lambda(xm).
    wcat = jnp.concatenate([gamma_w.T, -lambda_w.T], axis=0).astype(w_dtype)
    bias = gamma_b.astype(jnp.float32).reshape(1, Dout)

    # Pad Dout up to a multiple of 128 so the output block is lane-dense
    # (full-vreg stores).  Padded columns are zero and sliced off below.
    d_out_p = ((Dout + 127) // 128) * 128
    if d_out_p != Dout:
        wcat = jnp.pad(wcat, ((0, 0), (0, d_out_p - Dout)))
        bias = jnp.pad(bias, ((0, 0), (0, d_out_p - Dout)))

    if block_b is None:
        block_b = _pick_block_b(B, N)
    assert B % block_b == 0, "block_b must divide the batch size"
    grid = (B // block_b,)

    kernel = functools.partial(_perm_equiv_kernel, block_b=block_b,
                               n_set=N, d_in=Din, d_out_p=d_out_p)

    out = pl.pallas_call(
        kernel,
        out_shape=jax.ShapeDtypeStruct((B, N, d_out_p), x.dtype),
        grid_spec=pltpu.PrefetchScalarGridSpec(
            num_scalar_prefetch=0,
            grid=grid,
            in_specs=[
                pl.BlockSpec((block_b, N, Din), lambda b: (b, 0, 0)),
                # Constant index_map: weights/bias are copied into VMEM once
                # and stay resident for the whole grid.
                pl.BlockSpec((2 * Din, d_out_p), lambda b: (0, 0)),
                pl.BlockSpec((1, d_out_p), lambda b: (0, 0)),
            ],
            out_specs=pl.BlockSpec((block_b, N, d_out_p),
                                   lambda b: (b, 0, 0)),
        ),
        compiler_params=pltpu.CompilerParams(
            # Batch axis is independent -> megacore / v7x 2-TC sharding.
            dimension_semantics=("parallel",)),
    )(x, wcat, bias)

    return out[..., :Dout] if d_out_p != Dout else out


if __name__ == "__main__":
    # Shapes consistent with the module: batch=2, set size=8, in_dim=16,
    # out_dim=32.  block_b resolves to B -> grid=(1,): one kernel invocation.
    B, N, Din, Dout = 2, 8, 16, 32

    key = jax.random.PRNGKey(0)
    kx, kwg, kbg, kwl = jax.random.split(key, 4)

    x = jax.random.normal(kx, (B, N, Din), dtype=jnp.float32)

    # PyTorch-layout synthetic parameters: Gamma.W (Dout, Din), Gamma.b (Dout,),
    # Lambda.W (Dout, Din).
    gamma_w = jax.random.normal(kwg, (Dout, Din), dtype=jnp.float32) * 0.1
    gamma_b = jax.random.normal(kbg, (Dout,), dtype=jnp.float32) * 0.1
    lambda_w = jax.random.normal(kwl, (Dout, Din), dtype=jnp.float32) * 0.1

    out = permutation_equivariant(x, gamma_w, gamma_b, lambda_w)
    out = jax.block_until_ready(out)

    # Pure-JAX reference (same semantics as the PyTorch module).
    xm = jnp.max(x, axis=1, keepdims=True)                       # (B, 1, Din)
    ref = (jnp.einsum("bnd,od->bno", x, gamma_w) + gamma_b
           - jnp.einsum("bnd,od->bno", xm, lambda_w))
    assert out.shape == (B, N, Dout)
    assert jnp.allclose(out, ref, atol=1e-5, rtol=1e-5)

    # bf16 matmul-operand path (v6e/v7x MXU peak rate); f32 accumulate, f32
    # VPU math -> loose tolerance only from the operand cast.
    out_bf16 = jax.block_until_ready(
        permutation_equivariant(x, gamma_w, gamma_b, lambda_w,
                                compute_dtype=jnp.bfloat16))
    assert out_bf16.shape == (B, N, Dout)
    assert jnp.allclose(out_bf16, ref, atol=5e-2, rtol=5e-2)

    print("KERNEL_OK")
</pallas_src>

<mosaic_0001>
module attributes {stable_mosaic.version = 11 : i64} {
  func.func @_perm_equiv_kernel(%arg0: i32, %arg1: memref<2x8x16xf32, #tpu.memory_space<vmem>>, %arg2: memref<32x128xf32, #tpu.memory_space<vmem>>, %arg3: memref<1x128xf32, #tpu.memory_space<vmem>>, %arg4: memref<2x8x128xf32, #tpu.memory_space<vmem>>) attributes {dimension_semantics = [#tpu.dimension_semantics<parallel>], iteration_bounds = array<i64: 1>, scalar_prefetch = 0 : i64, scratch_operands = 0 : i64, tpu.core_type = #tpu.core_type<tc>, window_params = [{transform_indices = @transform_0, window_bounds = array<i64: 2, 8, 16>}, {pipeline_mode = #tpu.pipeline_mode<synchronous>, transform_indices = @transform_1, window_bounds = array<i64: 32, 128>}, {pipeline_mode = #tpu.pipeline_mode<synchronous>, transform_indices = @transform_2, window_bounds = array<i64: 1, 128>}, {transform_indices = @transform_3, window_bounds = array<i64: 2, 8, 128>}]} {
    %c0 = arith.constant 0 : index
    %c0_0 = arith.constant 0 : index
    %c0_1 = arith.constant 0 : index
    %0 = vector.load %arg1[%c0, %c0_0, %c0_1] : memref<2x8x16xf32, #tpu.memory_space<vmem>>, vector<2x8x16xf32>
    %cst = arith.constant dense<0xFF800000> : vector<2x16xf32>
    %1 = vector.multi_reduction <maximumf>, %0, %cst [1] : vector<2x8x16xf32> to vector<2x16xf32>
    %2 = vector.shape_cast %1 : vector<2x16xf32> to vector<2x1x16xf32>
    %3 = vector.shape_cast %2 : vector<2x1x16xf32> to vector<2x1x16xf32>
    %4 = vector.broadcast %3 : vector<2x1x16xf32> to vector<2x8x16xf32>
    %5 = vector.shape_cast %0 : vector<2x8x16xf32> to vector<16x16xf32>
    %6 = vector.shape_cast %4 : vector<2x8x16xf32> to vector<16x16xf32>
    %7 = tpu.concatenate %5, %6 in 1 : vector<16x16xf32>, vector<16x16xf32> -> vector<16x32xf32>
    %c0_2 = arith.constant 0 : index
    %c0_3 = arith.constant 0 : index
    %8 = vector.load %arg2[%c0_2, %c0_3] : memref<32x128xf32, #tpu.memory_space<vmem>>, vector<32x128xf32>
    %cst_4 = arith.constant dense<0.000000e+00> : vector<16x128xf32>
    %9 = tpu.matmul %7, %8, %cst_4 {dimension_numbers = #tpu.dot_dimension_numbers<[1], [0], [0], [1], [0, 0, 1, 1], [], []>} : vector<16x32xf32>, vector<32x128xf32>, vector<16x128xf32> -> vector<16x128xf32>
    %c0_5 = arith.constant 0 : index
    %c0_6 = arith.constant 0 : index
    %10 = vector.load %arg3[%c0_5, %c0_6] : memref<1x128xf32, #tpu.memory_space<vmem>>, vector<1x128xf32>
    %11 = vector.broadcast %10 : vector<1x128xf32> to vector<16x128xf32>
    %12 = arith.addf %9, %11 : vector<16x128xf32>
    %13 = vector.shape_cast %12 : vector<16x128xf32> to vector<2x8x128xf32>
    %c0_7 = arith.constant 0 : index
    %c0_8 = arith.constant 0 : index
    %c0_9 = arith.constant 0 : index
    %14 = vector.load %arg4[%c0_7, %c0_8, %c0_9] : memref<2x8x128xf32, #tpu.memory_space<vmem>>, vector<2x8x128xf32>
    tpu.vector_store %arg4[%c0_7, %c0_8, %c0_9], %13 {strides = array<i32>} : memref<2x8x128xf32, #tpu.memory_space<vmem>>, vector<2x8x128xf32>,
    return
  }
  func.func @transform_0(%arg0: i32) -> (i32, i32, i32) {
    %c0_i32 = arith.constant 0 : i32
    %c0_i32_0 = arith.constant 0 : i32
    %c0_i32_1 = arith.constant 0 : i32
    return %arg0, %c0_i32, %c0_i32_0 : i32, i32, i32
  }
  func.func @transform_1(%arg0: i32) -> (i32, i32) {
    %c0_i32 = arith.constant 0 : i32
    %c0_i32_0 = arith.constant 0 : i32
    %c0_i32_1 = arith.constant 0 : i32
    return %c0_i32, %c0_i32_0 : i32, i32
  }
  func.func @transform_2(%arg0: i32) -> (i32, i32) {
    %c0_i32 = arith.constant 0 : i32
    %c0_i32_0 = arith.constant 0 : i32
    %c0_i32_1 = arith.constant 0 : i32
    return %c0_i32, %c0_i32_0 : i32, i32
  }
  func.func @transform_3(%arg0: i32) -> (i32, i32, i32) {
    %c0_i32 = arith.constant 0 : i32
    %c0_i32_0 = arith.constant 0 : i32
    %c0_i32_1 = arith.constant 0 : i32
    return %arg0, %c0_i32, %c0_i32_0 : i32, i32, i32
  }
}

</mosaic_0001>

<llo_original>
// kernel: tpu_custom_call.1
$region0: #{tpu_custom_call.1}
  #allocation0 [shape = 'u32[]', space=smem, size = 0x4, offset = 0x4, fixed_abs, tag = 'smem constant byte address 0x4 - core index']
  #allocation1 [shape = 'u32[144,128]{1,0:T(1,128)}', space=vmem, size = 0x12000, scoped, tag = 'internal scratch']
  %s0 = inlined_call_operand.hbm [shape: f32[2,8,16], index: 0, kind: input, shape index: {}]
  %s1 = inlined_call_operand.hbm [shape: f32[32,128], index: 1, kind: input, shape index: {}]
  %s2 = inlined_call_operand.vmem [shape: f32[1,128], index: 2, kind: input, shape index: {}]
  %s3 = inlined_call_operand.hbm [shape: f32[2,8,128], index: 3, kind: output, shape index: {}]
  %s4 = sld [smem:[#allocation0]]
  $region30: #{tpu_custom_call.1} parent=0
    _
  %s6 = ssub.s32 1, %s4
  %s7 = scalar_select 0, %s6, %s4
  $region1: #{tpu_custom_call.1} parent=0
    #allocation2 [shape = 'u8[8192]{0}', space=vmem, size = 0x2000, scoped, tag = 'input window, operand 0, single buffered']
    #allocation3 [shape = 's32[1]{0}', space=sflag, size = 0x4, scoped, tag = 'scoped memory for tpu_custom_call.1']
    #allocation4 [shape = 's32[1]{0}', space=sflag, size = 0x4, scoped, tag = 'scoped memory for tpu_custom_call.1']
    #allocation5 [shape = 'u8[16384]{0}', space=vmem, size = 0x4000, scoped, tag = 'input window, operand 1, single buffered']
    #allocation6 [shape = 's32[1]{0}', space=sflag, size = 0x4, scoped, tag = 'scoped memory for tpu_custom_call.1']
    #allocation7 [shape = 'u8[8192]{0}', space=vmem, size = 0x2000, scoped, tag = 'output window, operand 0, single buffered']
    %8 = vsyncpa [#allocation3], 0
    %9 = vsyncpa [#allocation6], 0
    %10 = vsyncpa [#allocation4], 0
    // Predicated region
    $region2: #{tpu_custom_call.1} parent=1 // pred_check
      _
    $region3: #{tpu_custom_call.1} parent=1 // pred_check_branch
      %12 = sbr.rel (0) target = $region5
    $region4: #{tpu_custom_call.1} parent=1 // pred_region
      %s14 = ssub.s32 256, 256
      %15 = vsyncadd [#allocation3], %s14
      %s16 = sshll.u32 [#allocation2], 4
      %s17 = int_to_ptr.vmem [resolvable:$true] %s16
      %22 = dma.hbm_to_vmem [thread:$0]  %s0, 256, %s17, [#allocation3], 128, 128, 8
    $region5: #{tpu_custom_call.1} parent=1 // pred_fallthru
      _
    // Predicated region
    $region6: #{tpu_custom_call.1} parent=1 // pred_check
      _
    $region7: #{tpu_custom_call.1} parent=1 // pred_check_branch
      %24 = sbr.rel (0) target = $region9
    $region8: #{tpu_custom_call.1} parent=1 // pred_region
      %s26 = ssub.s32 512, 512
      %27 = vsyncadd [#allocation6], %s26
      %s28 = sshll.u32 [#allocation5], 4
      %s29 = int_to_ptr.vmem [resolvable:$true] %s28
      %34 = dma.hbm_to_vmem [thread:$0]  %s1, 512, %s29, [#allocation6], 128, 128, 8
    $region9: #{tpu_custom_call.1} parent=1 // pred_fallthru
      _
    // Predicated region
    $region10: #{tpu_custom_call.1} parent=1 // pred_check
      _
    $region11: #{tpu_custom_call.1} parent=1 // pred_check_branch
      %36 = sbr.rel (0) target = $region13
    $region12: #{tpu_custom_call.1} parent=1 // pred_region
      _
    $region13: #{tpu_custom_call.1} parent=1 // pred_fallthru
      _
    // Predicated region
    $region14: #{tpu_custom_call.1} parent=1 // pred_check
      _
    $region15: #{tpu_custom_call.1} parent=1 // pred_check_branch
      %38 = sbr.rel (0) target = $region17
    $region16: #{tpu_custom_call.1} parent=1 // pred_region
      %39 = dma.done [#allocation3], 256
    $region17: #{tpu_custom_call.1} parent=1 // pred_fallthru
      _
    // Predicated region
    $region18: #{tpu_custom_call.1} parent=1 // pred_check
      _
    $region19: #{tpu_custom_call.1} parent=1 // pred_check_branch
      %41 = sbr.rel (0) target = $region21
    $region20: #{tpu_custom_call.1} parent=1 // pred_region
      %42 = dma.done [#allocation6], 512
    $region21: #{tpu_custom_call.1} parent=1 // pred_fallthru
      _
    %v43 = vld [vmem:[#allocation2] sm:$0xff]
    %v44 = vld [vmem:[#allocation2 + $0x8] sm:$0xff]
    %vm45 = vcmask 130048
    %v46 = vsel %vm45, %v43, -inf
    %v47 = vrot.slane %v46, 4
    %v48 = vmax.f32 %v46, %v47
    %v49 = vrot.slane %v48, 2
    %v50 = vmax.f32 %v48, %v49
    %v51 = vrot.slane %v50, 1
    %v52 = vmax.f32 %v50, %v51
    %v53 = vsel %vm45, %v44, -inf
    %v54 = vrot.slane %v53, 4
    %v55 = vmax.f32 %v53, %v54
    %v56 = vrot.slane %v55, 2
    %v57 = vmax.f32 %v55, %v56
    %v58 = vrot.slane %v57, 1
    %v59 = vmax.f32 %v57, %v58
    %62 = vrot.lane.b32.xlu0 %v52, 16
    %v63 = vpop.permute.xlu0 %62
    %64 = vrot.lane.b32.xlu0 %v59, 16
    %v65 = vpop.permute.xlu0 %64
    %v68 = vsel %vm45, %v43, %v63
    %v69 = vsel %vm45, %v44, %v65
    %v70 = vld [vmem:[#allocation5] sm:$0xff]
    %v71 = vld [vmem:[#allocation5 + $0x8] sm:$0xff]
    %v72 = vld [vmem:[#allocation5 + $0x10] sm:$0xff]
    %v73 = vld [vmem:[#allocation5 + $0x18] sm:$0xff]
    %v74 = vld [vmem:[%s2] sm:$0x1]
    %v76 = vlaneseq
    %v77 = vshrl.u32 %v76, 7
    %v78 = vsub.s32 0, %v77
    %v79 = vrot.slane %v74, %v78
    %vm81 = vcmask 261120
    %v83 = vsel %vm81, %v68, 0
    %v86 = vsel %vm81, %v69, 0
    %88 = vmatprep.subr.mxu0 0.0
    %89 = vmatpush1.msra.mxu0 %v70
    %90 = vmatprep.subr.mxu0 0.0
    %91 = vmatpush1.msra.mxu0 %v71
    %92 = vmatprep.subr.mxu0 0.0
    %93 = vmatpush1.msra.mxu0 %v72
    %94 = vmatprep.subr.mxu0 0.0
    %95 = vmatpush1.msra.mxu0 %v73
    %96 = vmatprep.subr.mxu0 0.0
    %97 = vmatpush1.msra.mxu0 0.0
    %98 = vmatprep.subr.mxu0 0.0
    %99 = vmatpush1.msra.mxu0 0.0
    %100 = vmatprep.subr.mxu0 0.0
    %101 = vmatpush1.msra.mxu0 0.0
    %102 = vmatprep.subr.mxu0 0.0
    %103 = vmatpush1.msra.mxu0 0.0
    %104 = vmatprep.subr.mxu0 0.0
    %105 = vmatpush1.msra.mxu0 0.0
    %106 = vmatprep.subr.mxu0 0.0
    %107 = vmatpush1.msra.mxu0 0.0
    %108 = vmatprep.subr.mxu0 0.0
    %109 = vmatpush1.msra.mxu0 0.0
    %110 = vmatprep.subr.mxu0 0.0
    %111 = vmatpush1.msra.mxu0 0.0
    %112 = vmatprep.subr.mxu0 0.0
    %113 = vmatpush1.msra.mxu0 0.0
    %114 = vmatprep.subr.mxu0 0.0
    %115 = vmatpush1.msra.mxu0 0.0
    %116 = vmatprep.subr.mxu0 0.0
    %117 = vmatpush1.msra.mxu0 0.0
    %118 = vmatprep.subr.mxu0 0.0
    %119 = vmatpush1.msra.mxu0 0.0
    %120 = vmatprep.subr.mxu0 0.0
    %121 = vmatpush1.msra.mxu0 0.0
    %122 = vmatprep.subr.mxu0 0.0
    %123 = vmatpush1.msra.mxu0 0.0
    %124 = vmatprep.subr.mxu0 0.0
    %125 = vmatpush1.msra.mxu0 0.0
    %126 = vmatprep.subr.mxu0 0.0
    %127 = vmatpush1.msra.mxu0 0.0
    %128 = vmatprep.subr.mxu0 0.0
    %129 = vmatpush1.msra.mxu0 0.0
    %130 = vmatprep.subr.mxu0 0.0
    %131 = vmatpush1.msra.mxu0 0.0
    %132 = vmatprep.subr.mxu0 0.0
    %133 = vmatpush1.msra.mxu0 0.0
    %134 = vmatprep.subr.mxu0 0.0
    %135 = vmatpush1.msra.mxu0 0.0
    %136 = vmatprep.subr.mxu0 0.0
    %137 = vmatpush1.msra.mxu0 0.0
    %138 = vmatprep.subr.mxu0 0.0
    %139 = vmatpush1.msra.mxu0 0.0
    %140 = vmatprep.subr.mxu0 0.0
    %141 = vmatpush1.msra.mxu0 0.0
    %142 = vmatprep.subr.mxu0 0.0
    %143 = vmatpush1.msra.mxu0 0.0
    %144 = vmatprep.subr.mxu0 0.0
    %145 = vmatpush1.msra.mxu0 0.0
    %146 = vmatprep.subr.mxu0 0.0
    %147 = vmatpush1.msra.mxu0 0.0
    %148 = vmatprep.subr.mxu0 0.0
    %149 = vmatpush1.msra.mxu0 0.0
    %150 = vmatprep.subr.mxu0 0.0
    %151 = vmatpush1.msra.mxu0 0.0
    %152 = vmatprep.mubr.f32.mxu0 0.0
    %153 = vmatmul.mubr.f32.gmra.mrb[0].mxu0 %v83
    %v154 = vpop.f32.mrb[0].mxu0
    %v155 = vadd.f32 %v79, %v154
    %v156 = vpop.f32.mrb[0].mxu0
    %157 = vmatprep.mubr.f32.mxu0 0.0
    %158 = vmatmul.mubr.f32.gmra.mrb[0].mxu0 %v86
    %v159 = vpop.f32.mrb[0].mxu0
    %v160 = vadd.f32 %v79, %v159
    %v161 = vpop.f32.mrb[0].mxu0
    %162 = vdwg.mxu0
    %163 = vst [vmem:[#allocation7] sm:$0xff] %v155
    %164 = vst [vmem:[#allocation7 + $0x8] sm:$0xff] %v160
    // Predicated region
    $region22: #{tpu_custom_call.1} parent=1 // pred_check
      _
    $region23: #{tpu_custom_call.1} parent=1 // pred_check_branch
      %166 = sbr.rel (0) target = $region25
    $region24: #{tpu_custom_call.1} parent=1 // pred_region
      %s168 = ssub.s32 256, 256
      %169 = vsyncadd [#allocation4], %s168
      %s170 = sshll.u32 [#allocation7], 4
      %s171 = int_to_ptr.vmem [resolvable:$true] %s170
      %176 = dma.vmem_to_hbm [thread:$0]  %s171, 256, %s3, [#allocation4], 128, 128, 8
    $region25: #{tpu_custom_call.1} parent=1 // pred_fallthru
      _
    // Predicated region
    $region26: #{tpu_custom_call.1} parent=1 // pred_check
      _
    $region27: #{tpu_custom_call.1} parent=1 // pred_check_branch
      %178 = sbr.rel (0) target = $region29
    $region28: #{tpu_custom_call.1} parent=1 // pred_region
      %179 = dma.done [#allocation4], 256
    $region29: #{tpu_custom_call.1} parent=1 // pred_fallthru
      _
    %180 = vsyncpa [#allocation3], 1
    %181 = vsyncpa [#allocation6], 1
    %182 = vsyncpa [#allocation4], 1

</llo_original>
